<compile_context>
chip_gen: v5e
topology: v5e:2x2
jax: 0.10.0
libtpu: 0.0.40
codegen_flags: <defaults>
</compile_context>

<pallas_src>
import functools

import jax
import jax.numpy as jnp
from jax.experimental import pallas as pl
from jax.experimental.pallas import tpu as pltpu


def _round_up(x, m):
    return ((x + m - 1) // m) * m


def _vmem_capacity_bytes():
    try:
        return int(pltpu.get_tpu_info().vmem_capacity_bytes)
    except Exception:
        return 64 * 1024 * 1024  # conservative (v7x-sized) fallback


_VMEM_CAPACITY = _vmem_capacity_bytes()


def _vmem_limit_bytes(capacity):
    # ~70% of physical per-core VMEM, never above 96 MiB (v5e/v6e: ~89 MiB, v7x: ~45 MiB).
    return int(min(96 * 1024 * 1024, int(capacity * 0.7)))


def _choose_block_n(n, s_pad, s_k, f, c_pad, vmem_capacity):
    """Samples per grid step, sized from the real per-step VMEM footprint."""
    lanes_f = _round_up(f, 128)                       # x tiles are lane-padded to 128
    x_bytes = _round_up(s_pad, 16) * lanes_f * 2      # bf16 x tile bytes / sample / branch
    x_total = 2 * 2 * x_bytes                         # 2 branches x 2 pipeline buffers
    inter = 2 * s_k * c_pad * 4                       # f32 conv/ReLU intermediates (w/ slack)
    out_b = 2 * (2 * c_pad) * 4                       # double-buffered f32 output block
    per_sample = x_total + inter + out_b
    budget = int(vmem_capacity * 0.4)                 # headroom for weights/mask/spills
    nb = max(8, (budget // max(per_sample, 1)) // 8 * 8)
    # keep >= 2 grid steps so dimension_semantics=("parallel",) can shard over v7x's 2 TCs
    cap = max(8, _round_up(pl.cdiv(n, 2), 8))
    return min(nb, cap, 2048)


def _context_cnn_kernel(xpre_ref, xpos_ref, wpre_ref, wpos_ref, b_ref, mask_ref, o_ref):
    """Fused conv + bias + ReLU + time-max for both branches / all window sizes.

    xpre_ref, xpos_ref : (NB, S_pad, F)     bf16  time-padded inputs (streamed)
    wpre_ref, wpos_ref : (h_max, F, C_pad)  bf16  per-tap, channel-concatenated weights
    b_ref              : (2, C_pad)         f32   row 0 = pre bias, row 1 = pos bias
    mask_ref           : (S_k, C_pad)       f32   {0,1} per-channel valid-position mask
    o_ref              : (NB, 2*C_pad)      f32   [pre channels | pos channels]
    """
    NB, S_pad, F = xpre_ref.shape
    h_max, _, C_pad = wpre_ref.shape
    S_k = mask_ref.shape[0]

    mask = mask_ref[...]        # resident (constant index_map), loaded once per step
    biases = b_ref[...]         # (2, C_pad)

    def branch(x_ref, w_ref, b_row):
        x = x_ref[...]          # (NB, S_pad, F) bf16
        # conv as h_max accumulated MXU matmuls over time-shifted views (no im2col copy)
        acc = jnp.dot(x[:, 0:S_k, :].reshape(NB * S_k, F), w_ref[0],
                      preferred_element_type=jnp.float32)
        for k in range(1, h_max):
            acc = acc + jnp.dot(x[:, k:k + S_k, :].reshape(NB * S_k, F), w_ref[k],
                                preferred_element_type=jnp.float32)
        acc = acc.reshape(NB, S_k, C_pad) + b_row     # bias
        acc = jnp.maximum(acc, 0.0)                   # ReLU (f32)
        acc = acc * mask[None, :, :]                  # zero invalid tail (ReLU >= 0 keeps max)
        return jnp.max(acc, axis=1)                   # (NB, C_pad) max-pool over time

    # C_pad is a multiple of 128 -> each half-store is a lane-aligned, unmasked vst.
    o_ref[:, :C_pad] = branch(xpre_ref, wpre_ref, biases[0:1, :][:, None, :])
    o_ref[:, C_pad:] = branch(xpos_ref, wpos_ref, biases[1:2, :][:, None, :])


def _fused_context_cnn(x_pre, x_pos, w_pre, w_pos, b_all, mask, nb, vmem_limit):
    n_pad, s_pad, f = x_pre.shape
    h_max, _, c_pad = w_pre.shape
    s_k = mask.shape[0]
    ctot = 2 * c_pad
    grid = (n_pad // nb,)
    return pl.pallas_call(
        _context_cnn_kernel,
        out_shape=jax.ShapeDtypeStruct((n_pad, ctot), jnp.float32),
        grid_spec=pltpu.PrefetchScalarGridSpec(
            num_scalar_prefetch=0,
            grid=grid,
            in_specs=[
                pl.BlockSpec((nb, s_pad, f), lambda i: (i, 0, 0)),       # x_pre (streamed)
                pl.BlockSpec((nb, s_pad, f), lambda i: (i, 0, 0)),       # x_pos (streamed)
                pl.BlockSpec((h_max, f, c_pad), lambda i: (0, 0, 0)),    # resident pre weights
                pl.BlockSpec((h_max, f, c_pad), lambda i: (0, 0, 0)),    # resident pos weights
                pl.BlockSpec((2, c_pad), lambda i: (0, 0)),              # resident biases
                pl.BlockSpec((s_k, c_pad), lambda i: (0, 0)),            # resident valid mask
            ],
            out_specs=pl.BlockSpec((nb, ctot), lambda i: (i, 0)),
        ),
        compiler_params=pltpu.CompilerParams(
            dimension_semantics=("parallel",),
            vmem_limit_bytes=int(vmem_limit),
        ),
    )(x_pre, x_pos, w_pre, w_pos, b_all, mask)


def init_params(key, window_sizes, num_filters, feat_dim):
    """Synthetic params matching PyTorch Conv2d(1, num_filters, (h, feat_dim)) init.
    Kept in PyTorch layout: weight (C, 1, h, F), bias (C,)."""
    params = {"pre": [], "pos": []}
    for branch in ("pre", "pos"):
        for h in window_sizes:
            key, kw, kb = jax.random.split(key, 3)
            bound = 1.0 / float(h * feat_dim) ** 0.5
            w_pt = jax.random.uniform(kw, (num_filters, 1, h, feat_dim),
                                      jnp.float32, -bound, bound)
            b = jax.random.uniform(kb, (num_filters,), jnp.float32, -bound, bound)
            params[branch].append((w_pt, b))
    return params


def _pack_branch(plist, feat_dim, h_max, c_pad):
    """PyTorch conv weights -> (h_max, F, C_pad) bf16 tap weights + (C_pad,) f32 bias.
    Channels of every window are concatenated along C and zero-padded to C_pad; taps
    beyond a window's own h stay zero (they see only masked positions anyway)."""
    w_full = jnp.zeros((h_max, feat_dim, c_pad), jnp.float32)
    b_full = jnp.zeros((c_pad,), jnp.float32)
    off = 0
    for (w_pt, b) in plist:
        c, _, h, _f = w_pt.shape
        w = jnp.transpose(w_pt[:, 0], (1, 2, 0))          # (h, F, C)
        w_full = w_full.at[:h, :, off:off + c].set(w)
        b_full = b_full.at[off:off + c].set(b)
        off += c
    return w_full.astype(jnp.bfloat16), b_full


def _build_mask(plist, seq_len, s_k, c_pad):
    """Resident (S_k, C_pad) {0,1} f32 mask: window h is valid only for t < seq_len - h + 1."""
    t = jnp.arange(s_k)
    cols = []
    for (w_pt, _) in plist:
        c, _, h, _f = w_pt.shape
        col = (t < (seq_len - h + 1)).astype(jnp.float32)  # (S_k,)
        cols.append(jnp.tile(col[:, None], (1, c)))
    m = jnp.concatenate(cols, axis=1)                      # (S_k, c_half)
    return jnp.pad(m, ((0, 0), (0, c_pad - m.shape[1])))


@functools.partial(jax.jit, static_argnames=("batch_size",))
def context_cnn_forward(context_pre_h, context_pos_h, batch_size, params):
    """context_*_h: (N, 1, S, F) NCHW with C=1.  Returns a pair of
    (batch, num_contexts, num_filters * n_windows) arrays, matching the module."""
    x_pre = context_pre_h[:, 0]                    # (N, S, F)
    x_pos = context_pos_h[:, 0]
    n, s, f = x_pre.shape

    ws_pre = tuple(int(w.shape[2]) for (w, _) in params["pre"])
    ws_pos = tuple(int(w.shape[2]) for (w, _) in params["pos"])
    if ws_pre != ws_pos:
        raise ValueError("pre/pos branches must use the same window sizes")
    h_max = max(ws_pre)
    if s < h_max:
        raise ValueError("seq_len must be >= max window size (Conv2d would fail too)")

    c_half = sum(int(w.shape[0]) for (w, _) in params["pre"])
    c_pad = _round_up(c_half, 128)                 # 128-lane channel padding

    s_k = _round_up(s, 16)                         # kernel time extent (mask zeroes tail)
    s_pad = s_k + h_max - 1                        # input time extent needed for all taps

    nb = _choose_block_n(n, s_pad, s_k, f, c_pad, _VMEM_CAPACITY)
    n_pad = _round_up(n, nb)

    def prep(x):
        x = jnp.pad(x, ((0, n_pad - n), (0, s_pad - s), (0, 0)))
        return x.astype(jnp.bfloat16)              # HBM-bound input stream -> bf16

    x_pre_p = prep(x_pre)
    x_pos_p = prep(x_pos)

    w_pre, b_pre = _pack_branch(params["pre"], f, h_max, c_pad)
    w_pos, b_pos = _pack_branch(params["pos"], f, h_max, c_pad)
    b_all = jnp.stack([b_pre, b_pos], axis=0)      # (2, C_pad)
    mask = _build_mask(params["pre"], s, s_k, c_pad)

    out = _fused_context_cnn(x_pre_p, x_pos_p, w_pre, w_pos, b_all, mask, nb,
                             _vmem_limit_bytes(_VMEM_CAPACITY))
    pre = out[:n, :c_half].reshape(batch_size, -1, c_half)
    pos = out[:n, c_pad:c_pad + c_half].reshape(batch_size, -1, c_half)
    return pre, pos


def _reference_branch(context_h, plist):
    """Plain-JAX reference of conv + relu + max-pool + channel concat.
    Inputs/weights quantized through bf16 (like the kernel), accumulation in f32."""
    x = context_h[:, 0].astype(jnp.bfloat16).astype(jnp.float32)   # (N, S, F)
    outs = []
    for (w_pt, b) in plist:
        c, _, h, _f = w_pt.shape
        w = jnp.transpose(w_pt[:, 0], (1, 2, 0)).astype(jnp.bfloat16).astype(jnp.float32)
        s = x.shape[1]
        l = s - h + 1
        acc = jnp.zeros((x.shape[0], l, c), jnp.float32)
        for k in range(h):
            acc = acc + jnp.einsum("nsf,fc->nsc", x[:, k:k + l, :], w[k],
                                   precision=jax.lax.Precision.HIGHEST)
        acc = jnp.maximum(acc + b[None, None, :], 0.0)
        outs.append(jnp.max(acc, axis=1))
    return jnp.concatenate(outs, axis=1)


if __name__ == "__main__":
    batch_size = 2
    num_contexts = 4          # N = batch_size * num_contexts
    N = batch_size * num_contexts
    seq_len = 16
    feat_dim = 32
    num_filters = 8
    window_sizes = (2, 3)

    key = jax.random.PRNGKey(0)
    k_pre, k_pos, k_param = jax.random.split(key, 3)

    context_pre_h = jax.random.normal(k_pre, (N, 1, seq_len, feat_dim), jnp.float32)
    context_pos_h = jax.random.normal(k_pos, (N, 1, seq_len, feat_dim), jnp.float32)

    params = init_params(k_param, window_sizes, num_filters, feat_dim)

    pre_out, pos_out = context_cnn_forward(context_pre_h, context_pos_h,
                                           batch_size, params)
    jax.block_until_ready((pre_out, pos_out))

    # sanity check against plain-JAX reference (same bf16 input quantization)
    c_total = num_filters * len(window_sizes)
    ref_pre = _reference_branch(context_pre_h, params["pre"]).reshape(batch_size, -1, c_total)
    ref_pos = _reference_branch(context_pos_h, params["pos"]).reshape(batch_size, -1, c_total)
    assert pre_out.shape == (batch_size, num_contexts, c_total)
    assert pos_out.shape == (batch_size, num_contexts, c_total)
    assert jnp.allclose(pre_out, ref_pre, atol=2e-3, rtol=2e-3), "pre branch mismatch"
    assert jnp.allclose(pos_out, ref_pos, atol=2e-3, rtol=2e-3), "pos branch mismatch"

    print("KERNEL_OK")
</pallas_src>

<mosaic_0001>
module attributes {stable_mosaic.version = 11 : i64} {
  func.func @_context_cnn_kernel(%arg0: i32, %arg1: memref<8x18x32xbf16, #tpu.memory_space<vmem>>, %arg2: memref<8x18x32xbf16, #tpu.memory_space<vmem>>, %arg3: memref<3x32x128xbf16, #tpu.memory_space<vmem>>, %arg4: memref<3x32x128xbf16, #tpu.memory_space<vmem>>, %arg5: memref<2x128xf32, #tpu.memory_space<vmem>>, %arg6: memref<16x128xf32, #tpu.memory_space<vmem>>, %arg7: memref<8x256xf32, #tpu.memory_space<vmem>>) attributes {dimension_semantics = [#tpu.dimension_semantics<parallel>], iteration_bounds = array<i64: 1>, scalar_prefetch = 0 : i64, scratch_operands = 0 : i64, tpu.core_type = #tpu.core_type<tc>, window_params = [{transform_indices = @transform_0, window_bounds = array<i64: 8, 18, 32>}, {transform_indices = @transform_1, window_bounds = array<i64: 8, 18, 32>}, {pipeline_mode = #tpu.pipeline_mode<synchronous>, transform_indices = @transform_2, window_bounds = array<i64: 3, 32, 128>}, {pipeline_mode = #tpu.pipeline_mode<synchronous>, transform_indices = @transform_3, window_bounds = array<i64: 3, 32, 128>}, {pipeline_mode = #tpu.pipeline_mode<synchronous>, transform_indices = @transform_4, window_bounds = array<i64: 2, 128>}, {pipeline_mode = #tpu.pipeline_mode<synchronous>, transform_indices = @transform_5, window_bounds = array<i64: 16, 128>}, {transform_indices = @transform_6, window_bounds = array<i64: 8, 256>}]} {
    %c0 = arith.constant 0 : index
    %c0_0 = arith.constant 0 : index
    %0 = vector.load %arg6[%c0, %c0_0] : memref<16x128xf32, #tpu.memory_space<vmem>>, vector<16x128xf32>
    %c0_1 = arith.constant 0 : index
    %c0_2 = arith.constant 0 : index
    %1 = vector.load %arg5[%c0_1, %c0_2] : memref<2x128xf32, #tpu.memory_space<vmem>>, vector<2x128xf32>
    %2 = vector.extract_strided_slice %1 {offsets = [0, 0], sizes = [1, 128], strides = [1, 1]} : vector<2x128xf32> to vector<1x128xf32>
    %3 = vector.shape_cast %2 : vector<1x128xf32> to vector<1x1x128xf32>
    %c0_3 = arith.constant 0 : index
    %c0_4 = arith.constant 0 : index
    %c0_5 = arith.constant 0 : index
    %4 = vector.load %arg1[%c0_3, %c0_4, %c0_5] : memref<8x18x32xbf16, #tpu.memory_space<vmem>>, vector<8x18x32xbf16>
    %5 = vector.extract_strided_slice %4 {offsets = [0, 0, 0], sizes = [8, 16, 32], strides = [1, 1, 1]} : vector<8x18x32xbf16> to vector<8x16x32xbf16>
    %6 = vector.shape_cast %5 : vector<8x16x32xbf16> to vector<128x32xbf16>
    %c0_6 = arith.constant 0 : index
    %c0_7 = arith.constant 0 : index
    %c0_8 = arith.constant 0 : index
    %7 = vector.load %arg3[%c0_6, %c0_7, %c0_8] : memref<3x32x128xbf16, #tpu.memory_space<vmem>>, vector<1x32x128xbf16>
    %8 = vector.shape_cast %7 : vector<1x32x128xbf16> to vector<32x128xbf16>
    %cst = arith.constant dense<0.000000e+00> : vector<128x128xf32>
    %9 = tpu.matmul %6, %8, %cst {dimension_numbers = #tpu.dot_dimension_numbers<[1], [0], [0], [1], [0, 0, 1, 1], [], []>} : vector<128x32xbf16>, vector<32x128xbf16>, vector<128x128xf32> -> vector<128x128xf32>
    %10 = vector.extract_strided_slice %4 {offsets = [0, 1, 0], sizes = [8, 16, 32], strides = [1, 1, 1]} : vector<8x18x32xbf16> to vector<8x16x32xbf16>
    %11 = vector.shape_cast %10 : vector<8x16x32xbf16> to vector<128x32xbf16>
    %c1 = arith.constant 1 : index
    %c0_9 = arith.constant 0 : index
    %c0_10 = arith.constant 0 : index
    %12 = vector.load %arg3[%c1, %c0_9, %c0_10] : memref<3x32x128xbf16, #tpu.memory_space<vmem>>, vector<1x32x128xbf16>
    %13 = vector.shape_cast %12 : vector<1x32x128xbf16> to vector<32x128xbf16>
    %cst_11 = arith.constant dense<0.000000e+00> : vector<128x128xf32>
    %14 = tpu.matmul %11, %13, %cst_11 {dimension_numbers = #tpu.dot_dimension_numbers<[1], [0], [0], [1], [0, 0, 1, 1], [], []>} : vector<128x32xbf16>, vector<32x128xbf16>, vector<128x128xf32> -> vector<128x128xf32>
    %15 = arith.addf %9, %14 : vector<128x128xf32>
    %16 = vector.extract_strided_slice %4 {offsets = [0, 2, 0], sizes = [8, 16, 32], strides = [1, 1, 1]} : vector<8x18x32xbf16> to vector<8x16x32xbf16>
    %17 = vector.shape_cast %16 : vector<8x16x32xbf16> to vector<128x32xbf16>
    %c2 = arith.constant 2 : index
    %c0_12 = arith.constant 0 : index
    %c0_13 = arith.constant 0 : index
    %18 = vector.load %arg3[%c2, %c0_12, %c0_13] : memref<3x32x128xbf16, #tpu.memory_space<vmem>>, vector<1x32x128xbf16>
    %19 = vector.shape_cast %18 : vector<1x32x128xbf16> to vector<32x128xbf16>
    %cst_14 = arith.constant dense<0.000000e+00> : vector<128x128xf32>
    %20 = tpu.matmul %17, %19, %cst_14 {dimension_numbers = #tpu.dot_dimension_numbers<[1], [0], [0], [1], [0, 0, 1, 1], [], []>} : vector<128x32xbf16>, vector<32x128xbf16>, vector<128x128xf32> -> vector<128x128xf32>
    %21 = arith.addf %15, %20 : vector<128x128xf32>
    %22 = vector.shape_cast %21 : vector<128x128xf32> to vector<8x16x128xf32>
    %23 = vector.broadcast %3 : vector<1x1x128xf32> to vector<8x16x128xf32>
    %24 = arith.addf %22, %23 : vector<8x16x128xf32>
    %cst_15 = arith.constant 0.000000e+00 : f32
    %25 = vector.broadcast %cst_15 : f32 to vector<8x16x128xf32>
    %26 = arith.maximumf %24, %25 : vector<8x16x128xf32>
    %27 = vector.shape_cast %0 : vector<16x128xf32> to vector<1x16x128xf32>
    %28 = vector.broadcast %27 : vector<1x16x128xf32> to vector<8x16x128xf32>
    %29 = arith.mulf %26, %28 : vector<8x16x128xf32>
    %cst_16 = arith.constant dense<0xFF800000> : vector<8x128xf32>
    %30 = vector.multi_reduction <maximumf>, %29, %cst_16 [1] : vector<8x16x128xf32> to vector<8x128xf32>
    %c0_17 = arith.constant 0 : index
    %c0_18 = arith.constant 0 : index
    %31 = vector.load %arg7[%c0_17, %c0_18] : memref<8x256xf32, #tpu.memory_space<vmem>>, vector<8x128xf32>
    tpu.vector_store %arg7[%c0_17, %c0_18], %30 {strides = array<i32>} : memref<8x256xf32, #tpu.memory_space<vmem>>, vector<8x128xf32>,
    %32 = vector.extract_strided_slice %1 {offsets = [1, 0], sizes = [1, 128], strides = [1, 1]} : vector<2x128xf32> to vector<1x128xf32>
    %33 = vector.shape_cast %32 : vector<1x128xf32> to vector<1x1x128xf32>
    %c0_19 = arith.constant 0 : index
    %c0_20 = arith.constant 0 : index
    %c0_21 = arith.constant 0 : index
    %34 = vector.load %arg2[%c0_19, %c0_20, %c0_21] : memref<8x18x32xbf16, #tpu.memory_space<vmem>>, vector<8x18x32xbf16>
    %35 = vector.extract_strided_slice %34 {offsets = [0, 0, 0], sizes = [8, 16, 32], strides = [1, 1, 1]} : vector<8x18x32xbf16> to vector<8x16x32xbf16>
    %36 = vector.shape_cast %35 : vector<8x16x32xbf16> to vector<128x32xbf16>
    %c0_22 = arith.constant 0 : index
    %c0_23 = arith.constant 0 : index
    %c0_24 = arith.constant 0 : index
    %37 = vector.load %arg4[%c0_22, %c0_23, %c0_24] : memref<3x32x128xbf16, #tpu.memory_space<vmem>>, vector<1x32x128xbf16>
    %38 = vector.shape_cast %37 : vector<1x32x128xbf16> to vector<32x128xbf16>
    %cst_25 = arith.constant dense<0.000000e+00> : vector<128x128xf32>
    %39 = tpu.matmul %36, %38, %cst_25 {dimension_numbers = #tpu.dot_dimension_numbers<[1], [0], [0], [1], [0, 0, 1, 1], [], []>} : vector<128x32xbf16>, vector<32x128xbf16>, vector<128x128xf32> -> vector<128x128xf32>
    %40 = vector.extract_strided_slice %34 {offsets = [0, 1, 0], sizes = [8, 16, 32], strides = [1, 1, 1]} : vector<8x18x32xbf16> to vector<8x16x32xbf16>
    %41 = vector.shape_cast %40 : vector<8x16x32xbf16> to vector<128x32xbf16>
    %c1_26 = arith.constant 1 : index
    %c0_27 = arith.constant 0 : index
    %c0_28 = arith.constant 0 : index
    %42 = vector.load %arg4[%c1_26, %c0_27, %c0_28] : memref<3x32x128xbf16, #tpu.memory_space<vmem>>, vector<1x32x128xbf16>
    %43 = vector.shape_cast %42 : vector<1x32x128xbf16> to vector<32x128xbf16>
    %cst_29 = arith.constant dense<0.000000e+00> : vector<128x128xf32>
    %44 = tpu.matmul %41, %43, %cst_29 {dimension_numbers = #tpu.dot_dimension_numbers<[1], [0], [0], [1], [0, 0, 1, 1], [], []>} : vector<128x32xbf16>, vector<32x128xbf16>, vector<128x128xf32> -> vector<128x128xf32>
    %45 = arith.addf %39, %44 : vector<128x128xf32>
    %46 = vector.extract_strided_slice %34 {offsets = [0, 2, 0], sizes = [8, 16, 32], strides = [1, 1, 1]} : vector<8x18x32xbf16> to vector<8x16x32xbf16>
    %47 = vector.shape_cast %46 : vector<8x16x32xbf16> to vector<128x32xbf16>
    %c2_30 = arith.constant 2 : index
    %c0_31 = arith.constant 0 : index
    %c0_32 = arith.constant 0 : index
    %48 = vector.load %arg4[%c2_30, %c0_31, %c0_32] : memref<3x32x128xbf16, #tpu.memory_space<vmem>>, vector<1x32x128xbf16>
    %49 = vector.shape_cast %48 : vector<1x32x128xbf16> to vector<32x128xbf16>
    %cst_33 = arith.constant dense<0.000000e+00> : vector<128x128xf32>
    %50 = tpu.matmul %47, %49, %cst_33 {dimension_numbers = #tpu.dot_dimension_numbers<[1], [0], [0], [1], [0, 0, 1, 1], [], []>} : vector<128x32xbf16>, vector<32x128xbf16>, vector<128x128xf32> -> vector<128x128xf32>
    %51 = arith.addf %45, %50 : vector<128x128xf32>
    %52 = vector.shape_cast %51 : vector<128x128xf32> to vector<8x16x128xf32>
    %53 = vector.broadcast %33 : vector<1x1x128xf32> to vector<8x16x128xf32>
    %54 = arith.addf %52, %53 : vector<8x16x128xf32>
    %cst_34 = arith.constant 0.000000e+00 : f32
    %55 = vector.broadcast %cst_34 : f32 to vector<8x16x128xf32>
    %56 = arith.maximumf %54, %55 : vector<8x16x128xf32>
    %57 = vector.shape_cast %0 : vector<16x128xf32> to vector<1x16x128xf32>
    %58 = vector.broadcast %57 : vector<1x16x128xf32> to vector<8x16x128xf32>
    %59 = arith.mulf %56, %58 : vector<8x16x128xf32>
    %cst_35 = arith.constant dense<0xFF800000> : vector<8x128xf32>
    %60 = vector.multi_reduction <maximumf>, %59, %cst_35 [1] : vector<8x16x128xf32> to vector<8x128xf32>
    %c0_36 = arith.constant 0 : index
    %c128 = arith.constant 128 : index
    %61 = vector.load %arg7[%c0_36, %c128] : memref<8x256xf32, #tpu.memory_space<vmem>>, vector<8x128xf32>
    tpu.vector_store %arg7[%c0_36, %c128], %60 {strides = array<i32>} : memref<8x256xf32, #tpu.memory_space<vmem>>, vector<8x128xf32>,
    return
  }
  func.func @transform_0(%arg0: i32) -> (i32, i32, i32) {
    %c0_i32 = arith.constant 0 : i32
    %c0_i32_0 = arith.constant 0 : i32
    %c0_i32_1 = arith.constant 0 : i32
    return %arg0, %c0_i32, %c0_i32_0 : i32, i32, i32
  }
  func.func @transform_1(%arg0: i32) -> (i32, i32, i32) {
    %c0_i32 = arith.constant 0 : i32
    %c0_i32_0 = arith.constant 0 : i32
    %c0_i32_1 = arith.constant 0 : i32
    return %arg0, %c0_i32, %c0_i32_0 : i32, i32, i32
  }
  func.func @transform_2(%arg0: i32) -> (i32, i32, i32) {
    %c0_i32 = arith.constant 0 : i32
    %c0_i32_0 = arith.constant 0 : i32
    %c0_i32_1 = arith.constant 0 : i32
    %c0_i32_2 = arith.constant 0 : i32
    return %c0_i32, %c0_i32_0, %c0_i32_1 : i32, i32, i32
  }
  func.func @transform_3(%arg0: i32) -> (i32, i32, i32) {
    %c0_i32 = arith.constant 0 : i32
    %c0_i32_0 = arith.constant 0 : i32
    %c0_i32_1 = arith.constant 0 : i32
    %c0_i32_2 = arith.constant 0 : i32
    return %c0_i32, %c0_i32_0, %c0_i32_1 : i32, i32, i32
  }
  func.func @transform_4(%arg0: i32) -> (i32, i32) {
    %c0_i32 = arith.constant 0 : i32
    %c0_i32_0 = arith.constant 0 : i32
    %c0_i32_1 = arith.constant 0 : i32
    return %c0_i32, %c0_i32_0 : i32, i32
  }
  func.func @transform_5(%arg0: i32) -> (i32, i32) {
    %c0_i32 = arith.constant 0 : i32
    %c0_i32_0 = arith.constant 0 : i32
    %c0_i32_1 = arith.constant 0 : i32
    return %c0_i32, %c0_i32_0 : i32, i32
  }
  func.func @transform_6(%arg0: i32) -> (i32, i32) {
    %c0_i32 = arith.constant 0 : i32
    %c0_i32_0 = arith.constant 0 : i32
    return %arg0, %c0_i32 : i32, i32
  }
}

</mosaic_0001>

<llo_original>
// kernel: context_cnn_forward.1
$region0: #{context_cnn_forward.1}
  #allocation0 [shape = 'u32[]', space=smem, size = 0x4, offset = 0x4, fixed_abs, tag = 'smem constant byte address 0x4 - core index']
  #allocation1 [shape = 'u32[72,128]{1,0:T(1,128)}', space=vmem, size = 0x9000, scoped, tag = 'internal scratch']
  %s0 = inlined_call_operand.vmem [shape: bf16[8,18,32], index: 0, kind: input, shape index: {}]
  %s1 = inlined_call_operand.vmem [shape: bf16[8,18,32], index: 1, kind: input, shape index: {}]
  %s2 = inlined_call_operand.vmem [shape: bf16[3,32,128], index: 2, kind: input, shape index: {}]
  %s3 = inlined_call_operand.vmem [shape: bf16[3,32,128], index: 3, kind: input, shape index: {}]
  %s4 = inlined_call_operand.vmem [shape: f32[2,128], index: 4, kind: input, shape index: {}]
  %s5 = inlined_call_operand.vmem [shape: f32[16,128], index: 5, kind: input, shape index: {}]
  %s6 = inlined_call_operand.vmem [shape: f32[8,256], index: 6, kind: output, shape index: {}]
  %s7 = sld [smem:[#allocation0]]
  $region34: #{context_cnn_forward.1} parent=0
    _
  %s9 = ssub.s32 1, %s7
  %s10 = scalar_select 0, %s9, %s7
  // Predicated region
  $region2: #{context_cnn_forward.1} parent=0 // pred_check
    _
  $region3: #{context_cnn_forward.1} parent=0 // pred_check_branch
    %12 = sbr.rel (0) target = $region5
  $region4: #{context_cnn_forward.1} parent=0 // pred_region
    _
  $region5: #{context_cnn_forward.1} parent=0 // pred_fallthru
    _
  // Predicated region
  $region6: #{context_cnn_forward.1} parent=0 // pred_check
    _
  $region7: #{context_cnn_forward.1} parent=0 // pred_check_branch
    %14 = sbr.rel (0) target = $region9
  $region8: #{context_cnn_forward.1} parent=0 // pred_region
    _
  $region9: #{context_cnn_forward.1} parent=0 // pred_fallthru
    _
  // Predicated region
  $region10: #{context_cnn_forward.1} parent=0 // pred_check
    _
  $region11: #{context_cnn_forward.1} parent=0 // pred_check_branch
    %16 = sbr.rel (0) target = $region13
  $region12: #{context_cnn_forward.1} parent=0 // pred_region
    _
  $region13: #{context_cnn_forward.1} parent=0 // pred_fallthru
    _
  // Predicated region
  $region14: #{context_cnn_forward.1} parent=0 // pred_check
    _
  $region15: #{context_cnn_forward.1} parent=0 // pred_check_branch
    %18 = sbr.rel (0) target = $region17
  $region16: #{context_cnn_forward.1} parent=0 // pred_region
    _
  $region17: #{context_cnn_forward.1} parent=0 // pred_fallthru
    _
  // Predicated region
  $region18: #{context_cnn_forward.1} parent=0 // pred_check
    _
  $region19: #{context_cnn_forward.1} parent=0 // pred_check_branch
    %20 = sbr.rel (0) target = $region21
  $region20: #{context_cnn_forward.1} parent=0 // pred_region
    _
  $region21: #{context_cnn_forward.1} parent=0 // pred_fallthru
    _
  // Predicated region
  $region22: #{context_cnn_forward.1} parent=0 // pred_check
    _
  $region23: #{context_cnn_forward.1} parent=0 // pred_check_branch
    %22 = sbr.rel (0) target = $region25
  $region24: #{context_cnn_forward.1} parent=0 // pred_region
    _
  $region25: #{context_cnn_forward.1} parent=0 // pred_fallthru
    _
  %v24 = vld [vmem:[%s5] sm:$0xff]
  %v25 = vld [vmem:[%s5 + $0x8] sm:$0xff]
  %v26 = vld [vmem:[%s4] sm:$0x3]
  %v27 = vld [vmem:[%s0] sm:$0xf]
  %v28 = vld [vmem:[%s0 + $0x4] sm:$0xf]
  %v29 = vld [vmem:[%s0 + $0x8] sm:$0x1]
  %v30 = vld [vmem:[%s0 + $0xc] sm:$0xf]
  %v31 = vld [vmem:[%s0 + $0x10] sm:$0xf]
  %v32 = vld [vmem:[%s0 + $0x14] sm:$0x1]
  %v33 = vld [vmem:[%s0 + $0x18] sm:$0xf]
  %v34 = vld [vmem:[%s0 + $0x1c] sm:$0xf]
  %v35 = vld [vmem:[%s0 + $0x20] sm:$0x1]
  %v36 = vld [vmem:[%s0 + $0x24] sm:$0xf]
  %v37 = vld [vmem:[%s0 + $0x28] sm:$0xf]
  %v38 = vld [vmem:[%s0 + $0x2c] sm:$0x1]
  %v39 = vld [vmem:[%s0 + $0x30] sm:$0xf]
  %v40 = vld [vmem:[%s0 + $0x34] sm:$0xf]
  %v41 = vld [vmem:[%s0 + $0x38] sm:$0x1]
  %v42 = vld [vmem:[%s0 + $0x3c] sm:$0xf]
  %v43 = vld [vmem:[%s0 + $0x40] sm:$0xf]
  %v44 = vld [vmem:[%s0 + $0x44] sm:$0x1]
  %v45 = vld [vmem:[%s0 + $0x48] sm:$0xf]
  %v46 = vld [vmem:[%s0 + $0x4c] sm:$0xf]
  %v47 = vld [vmem:[%s0 + $0x50] sm:$0x1]
  %v48 = vld [vmem:[%s0 + $0x54] sm:$0xf]
  %v49 = vld [vmem:[%s0 + $0x58] sm:$0xf]
  %v50 = vld [vmem:[%s0 + $0x5c] sm:$0x1]
  %v51 = vld [vmem:[%s2] sm:$0xf]
  %v52 = vld [vmem:[%s2 + $0x4] sm:$0xf]
  %v53 = vld [vmem:[%s2 + $0x8] sm:$0xf]
  %v54 = vld [vmem:[%s2 + $0xc] sm:$0xf]
  %vm55 = vsmask.f32 3328
  %vm56 = vsmask.f32 7440
  %vm57 = vmor %vm55, %vm56
  %v59 = vshrl.u32 %v27, 16
  %v61 = vrot.slane %v59, 4
  %v62 = vshll.u32 %v27, 16
  %v64 = vrot.slane %v62, 5
  %v65 = vor.u32 %v61, %v64
  %v66 = vrot.slane %v65, 4
  %v68 = vshll.u32 %v28, 16
  %v70 = vrot.slane %v68, 5
  %v71 = vsel %vm57, %v66, %v70
  %v72 = vshrl.u32 %v28, 16
  %v74 = vrot.slane %v72, 4
  %v75 = vor.u32 %v74, %v70
  %v76 = vrot.slane %v75, 4
  %v78 = vshll.u32 %v29, 16
  %v80 = vrot.slane %v78, 5
  %v81 = vsel %vm57, %v76, %v80
  %v83 = vshrl.u32 %v30, 16
  %v85 = vrot.slane %v83, 4
  %v86 = vshll.u32 %v30, 16
  %v88 = vrot.slane %v86, 5
  %v89 = vor.u32 %v85, %v88
  %v90 = vrot.slane %v89, 4
  %v92 = vshll.u32 %v31, 16
  %v94 = vrot.slane %v92, 5
  %v95 = vsel %vm57, %v90, %v94
  %v96 = vshrl.u32 %v31, 16
  %v98 = vrot.slane %v96, 4
  %v99 = vor.u32 %v98, %v94
  %v100 = vrot.slane %v99, 4
  %v102 = vshll.u32 %v32, 16
  %v104 = vrot.slane %v102, 5
  %v105 = vsel %vm57, %v100, %v104
  %v107 = vshrl.u32 %v33, 16
  %v109 = vrot.slane %v107, 4
  %v110 = vshll.u32 %v33, 16
  %v112 = vrot.slane %v110, 5
  %v113 = vor.u32 %v109, %v112
  %v114 = vrot.slane %v113, 4
  %v116 = vshll.u32 %v34, 16
  %v118 = vrot.slane %v116, 5
  %v119 = vsel %vm57, %v114, %v118
  %v120 = vshrl.u32 %v34, 16
  %v122 = vrot.slane %v120, 4
  %v123 = vor.u32 %v122, %v118
  %v124 = vrot.slane %v123, 4
  %v126 = vshll.u32 %v35, 16
  %v128 = vrot.slane %v126, 5
  %v129 = vsel %vm57, %v124, %v128
  %v131 = vshrl.u32 %v36, 16
  %v133 = vrot.slane %v131, 4
  %v134 = vshll.u32 %v36, 16
  %v136 = vrot.slane %v134, 5
  %v137 = vor.u32 %v133, %v136
  %v138 = vrot.slane %v137, 4
  %v140 = vshll.u32 %v37, 16
  %v142 = vrot.slane %v140, 5
  %v143 = vsel %vm57, %v138, %v142
  %v144 = vshrl.u32 %v37, 16
  %v146 = vrot.slane %v144, 4
  %v147 = vor.u32 %v146, %v142
  %v148 = vrot.slane %v147, 4
  %v150 = vshll.u32 %v38, 16
  %v152 = vrot.slane %v150, 5
  %v153 = vsel %vm57, %v148, %v152
  %v155 = vshrl.u32 %v39, 16
  %v157 = vrot.slane %v155, 4
  %v158 = vshll.u32 %v39, 16
  %v160 = vrot.slane %v158, 5
  %v161 = vor.u32 %v157, %v160
  %v162 = vrot.slane %v161, 4
  %v164 = vshll.u32 %v40, 16
  %v166 = vrot.slane %v164, 5
  %v167 = vsel %vm57, %v162, %v166
  %v168 = vshrl.u32 %v40, 16
  %v170 = vrot.slane %v168, 4
  %v171 = vor.u32 %v170, %v166
  %v172 = vrot.slane %v171, 4
  %v174 = vshll.u32 %v41, 16
  %v176 = vrot.slane %v174, 5
  %v177 = vsel %vm57, %v172, %v176
  %v179 = vshrl.u32 %v42, 16
  %v181 = vrot.slane %v179, 4
  %v182 = vshll.u32 %v42, 16
  %v184 = vrot.slane %v182, 5
  %v185 = vor.u32 %v181, %v184
  %v186 = vrot.slane %v185, 4
  %v188 = vshll.u32 %v43, 16
  %v190 = vrot.slane %v188, 5
  %v191 = vsel %vm57, %v186, %v190
  %v192 = vshrl.u32 %v43, 16
  %v194 = vrot.slane %v192, 4
  %v195 = vor.u32 %v194, %v190
  %v196 = vrot.slane %v195, 4
  %v198 = vshll.u32 %v44, 16
  %v200 = vrot.slane %v198, 5
  %v201 = vsel %vm57, %v196, %v200
  %v203 = vshrl.u32 %v45, 16
  %v205 = vrot.slane %v203, 4
  %v206 = vshll.u32 %v45, 16
  %v208 = vrot.slane %v206, 5
  %v209 = vor.u32 %v205, %v208
  %v210 = vrot.slane %v209, 4
  %v212 = vshll.u32 %v46, 16
  %v214 = vrot.slane %v212, 5
  %v215 = vsel %vm57, %v210, %v214
  %v216 = vshrl.u32 %v46, 16
  %v218 = vrot.slane %v216, 4
  %v219 = vor.u32 %v218, %v214
  %v220 = vrot.slane %v219, 4
  %v222 = vshll.u32 %v47, 16
  %v224 = vrot.slane %v222, 5
  %v225 = vsel %vm57, %v220, %v224
  %v227 = vshrl.u32 %v48, 16
  %v229 = vrot.slane %v227, 4
  %v230 = vshll.u32 %v48, 16
  %v232 = vrot.slane %v230, 5
  %v233 = vor.u32 %v229, %v232
  %v234 = vrot.slane %v233, 4
  %v236 = vshll.u32 %v49, 16
  %v238 = vrot.slane %v236, 5
  %v239 = vsel %vm57, %v234, %v238
  %v240 = vshrl.u32 %v49, 16
  %v242 = vrot.slane %v240, 4
  %v243 = vor.u32 %v242, %v238
  %v244 = vrot.slane %v243, 4
  %v246 = vshll.u32 %v50, 16
  %v248 = vrot.slane %v246, 5
  %v249 = vsel %vm57, %v244, %v248
  %s250 = scalar_lea.vmem %s2, 16
  %v251 = vld [vmem:[%s250] sm:$0xf]
  %v252 = vld [vmem:[%s250 + $0x4] sm:$0xf]
  %v253 = vld [vmem:[%s250 + $0x8] sm:$0xf]
  %v254 = vld [vmem:[%s250 + $0xc] sm:$0xf]
  %v255 = vunpack.c.l.b16 %v71
  %v256 = vunpack.c.l.b16 %v81
  %v257 = vunpack.c.l.b16 %v95
  %v258 = vunpack.c.l.b16 %v105
  %v259 = vunpack.c.l.b16 %v119
  %v260 = vunpack.c.l.b16 %v129
  %v261 = vunpack.c.l.b16 %v143
  %v262 = vunpack.c.l.b16 %v153
  %v263 = vunpack.c.l.b16 %v167
  %v264 = vunpack.c.l.b16 %v177
  %v265 = vunpack.c.l.b16 %v191
  %v266 = vunpack.c.l.b16 %v201
  %v267 = vunpack.c.l.b16 %v215
  %v268 = vunpack.c.l.b16 %v225
  %v269 = vunpack.c.l.b16 %v239
  %v270 = vunpack.c.l.b16 %v249
  %v271 = vpack.c.b16 %v256, %v255
  %v272 = vpack.c.b16 %v258, %v257
  %v273 = vpack.c.b16 %v260, %v259
  %v274 = vpack.c.b16 %v262, %v261
  %v275 = vpack.c.b16 %v264, %v263
  %v276 = vpack.c.b16 %v266, %v265
  %v277 = vpack.c.b16 %v268, %v267
  %v278 = vpack.c.b16 %v270, %v269
  %v283 = vunpack.c.l.b16 %v251
  %v284 = vunpack.c.l.b16 %v252
  %v285 = vunpack.c.l.b16 %v253
  %v286 = vunpack.c.l.b16 %v254
  %v287 = vpack.c.b16 %v284, %v283
  %v288 = vpack.c.b16 %v286, %v285
  %vm291 = vcmask 261120
  %v293 = vsel %vm291, %v271, 0
  %v296 = vsel %vm291, %v272, 0
  %v299 = vsel %vm291, %v273, 0
  %v302 = vsel %vm291, %v274, 0
  %v305 = vsel %vm291, %v275, 0
  %v308 = vsel %vm291, %v276, 0
  %v311 = vsel %vm291, %v277, 0
  %v314 = vsel %vm291, %v278, 0
  %316 = vmatpush.bf16.msra.mxu0 0
  %317 = vmatpush.bf16.msra.mxu0 0
  %318 = vmatpush.bf16.msra.mxu0 0
  %319 = vmatpush.bf16.msra.mxu0 0
  %320 = vmatpush.bf16.msra.mxu0 0
  %321 = vmatpush.bf16.msra.mxu0 0
  %322 = vmatpush.bf16.msra.mxu0 %v288
  %323 = vmatpush.bf16.msra.mxu0 %v287
  %324 = vmatmul.bf16.gmra.mxu0 %v293
  %v325 = vpop.f32.mrf.mxu0
  %v326 = vadd.f32 0.0, %v325
  %v327 = vpop.f32.mrf.mxu0
  %v328 = vadd.f32 0.0, %v327
  %329 = vmatmul.bf16.gmra.mxu0 %v296
  %v330 = vpop.f32.mrf.mxu0
  %v331 = vadd.f32 0.0, %v330
  %v332 = vpop.f32.mrf.mxu0
  %v333 = vadd.f32 0.0, %v332
  %334 = vmatmul.bf16.gmra.mxu0 %v299
  %v335 = vpop.f32.mrf.mxu0
  %v336 = vadd.f32 0.0, %v335
  %v337 = vpop.f32.mrf.mxu0
  %v338 = vadd.f32 0.0, %v337
  %339 = vmatmul.bf16.gmra.mxu0 %v302
  %v340 = vpop.f32.mrf.mxu0
  %v341 = vadd.f32 0.0, %v340
  %v342 = vpop.f32.mrf.mxu0
  %v343 = vadd.f32 0.0, %v342
  %344 = vmatmul.bf16.gmra.mxu0 %v305
  %v345 = vpop.f32.mrf.mxu0
  %v346 = vadd.f32 0.0, %v345
  %v347 = vpop.f32.mrf.mxu0
  %v348 = vadd.f32 0.0, %v347
  %349 = vmatmul.bf16.gmra.mxu0 %v308
  %v350 = vpop.f32.mrf.mxu0
  %v351 = vadd.f32 0.0, %v350
  %v352 = vpop.f32.mrf.mxu0
  %v353 = vadd.f32 0.0, %v352
  %354 = vmatmul.bf16.gmra.mxu0 %v311
  %v355 = vpop.f32.mrf.mxu0
  %v356 = vadd.f32 0.0, %v355
  %v357 = vpop.f32.mrf.mxu0
  %v358 = vadd.f32 0.0, %v357
  %359 = vmatmul.bf16.gmra.mxu0 %v314
  %v360 = vpop.f32.mrf.mxu0
  %v361 = vadd.f32 0.0, %v360
  %v362 = vpop.f32.mrf.mxu0
  %v363 = vadd.f32 0.0, %v362
  %364 = vdwg.mxu0
  %v381 = vunpack.c.l.b16 %v27
  %v382 = vunpack.c.l.b16 %v28
  %v383 = vunpack.c.l.b16 %v30
  %v384 = vunpack.c.l.b16 %v31
  %v385 = vunpack.c.l.b16 %v33
  %v386 = vunpack.c.l.b16 %v34
  %v387 = vunpack.c.l.b16 %v36
  %v388 = vunpack.c.l.b16 %v37
  %v389 = vunpack.c.l.b16 %v39
  %v390 = vunpack.c.l.b16 %v40
  %v391 = vunpack.c.l.b16 %v42
  %v392 = vunpack.c.l.b16 %v43
  %v393 = vunpack.c.l.b16 %v45
  %v394 = vunpack.c.l.b16 %v46
  %v395 = vunpack.c.l.b16 %v48
  %v396 = vunpack.c.l.b16 %v49
  %v397 = vpack.c.b16 %v382, %v381
  %v398 = vpack.c.b16 %v384, %v383
  %v399 = vpack.c.b16 %v386, %v385
  %v400 = vpack.c.b16 %v388, %v387
  %v401 = vpack.c.b16 %v390, %v389
  %v402 = vpack.c.b16 %v392, %v391
  %v403 = vpack.c.b16 %v394, %v393
  %v404 = vpack.c.b16 %v396, %v395
  %v409 = vunpack.c.l.b16 %v51
  %v410 = vunpack.c.l.b16 %v52
  %v411 = vunpack.c.l.b16 %v53
  %v412 = vunpack.c.l.b16 %v54
  %v413 = vpack.c.b16 %v410, %v409
  %v414 = vpack.c.b16 %v412, %v411
  %v418 = vsel %vm291, %v397, 0
  %v421 = vsel %vm291, %v398, 0
  %v424 = vsel %vm291, %v399, 0
  %v427 = vsel %vm291, %v400, 0
  %v430 = vsel %vm291, %v401, 0
  %v433 = vsel %vm291, %v402, 0
  %v436 = vsel %vm291, %v403, 0
  %v439 = vsel %vm291, %v404, 0
  %441 = vmatpush.bf16.msra.mxu0 0
  %442 = vmatpush.bf16.msra.mxu0 0
  %443 = vmatpush.bf16.msra.mxu0 0
  %444 = vmatpush.bf16.msra.mxu0 0
  %445 = vmatpush.bf16.msra.mxu0 0
  %446 = vmatpush.bf16.msra.mxu0 0
  %447 = vmatpush.bf16.msra.mxu0 %v414
  %448 = vmatpush.bf16.msra.mxu0 %v413
  %449 = vmatmul.bf16.gmra.mxu0 %v418
  %v450 = vpop.f32.mrf.mxu0
  %v451 = vadd.f32 %v326, %v450
  %v452 = vpop.f32.mrf.mxu0
  %v453 = vadd.f32 %v328, %v452
  %454 = vmatmul.bf16.gmra.mxu0 %v421
  %v455 = vpop.f32.mrf.mxu0
  %v456 = vadd.f32 %v331, %v455
  %v457 = vpop.f32.mrf.mxu0
  %v458 = vadd.f32 %v333, %v457
  %459 = vmatmul.bf16.gmra.mxu0 %v424
  %v460 = vpop.f32.mrf.mxu0
  %v461 = vadd.f32 %v336, %v460
  %v462 = vpop.f32.mrf.mxu0
  %v463 = vadd.f32 %v338, %v462
  %464 = vmatmul.bf16.gmra.mxu0 %v427
  %v465 = vpop.f32.mrf.mxu0
  %v466 = vadd.f32 %v341, %v465
  %v467 = vpop.f32.mrf.mxu0
  %v468 = vadd.f32 %v343, %v467
  %469 = vmatmul.bf16.gmra.mxu0 %v430
  %v470 = vpop.f32.mrf.mxu0
  %v471 = vadd.f32 %v346, %v470
  %v472 = vpop.f32.mrf.mxu0
  %v473 = vadd.f32 %v348, %v472
  %474 = vmatmul.bf16.gmra.mxu0 %v433
  %v475 = vpop.f32.mrf.mxu0
  %v476 = vadd.f32 %v351, %v475
  %v477 = vpop.f32.mrf.mxu0
  %v478 = vadd.f32 %v353, %v477
  %479 = vmatmul.bf16.gmra.mxu0 %v436
  %v480 = vpop.f32.mrf.mxu0
  %v481 = vadd.f32 %v356, %v480
  %v482 = vpop.f32.mrf.mxu0
  %v483 = vadd.f32 %v358, %v482
  %484 = vmatmul.bf16.gmra.mxu0 %v439
  %v485 = vpop.f32.mrf.mxu0
  %v486 = vadd.f32 %v361, %v485
  %v487 = vpop.f32.mrf.mxu0
  %v488 = vadd.f32 %v363, %v487
  %489 = vdwg.mxu0
  %vm498 = vcmask 1042432
  %vm499 = vcmask 1046532
  %vm500 = vmor %vm498, %vm499
  %v501 = vrot.slane %v27, 5
  %v502 = vrot.slane %v501, 4
  %v503 = vrot.slane %v28, 5
  %v504 = vsel %vm500, %v502, %v503
  %v505 = vrot.slane %v503, 4
  %v506 = vrot.slane %v29, 5
  %v507 = vsel %vm500, %v505, %v506
  %v508 = vrot.slane %v30, 5
  %v509 = vrot.slane %v508, 4
  %v510 = vrot.slane %v31, 5
  %v511 = vsel %vm500, %v509, %v510
  %v512 = vrot.slane %v510, 4
  %v513 = vrot.slane %v32, 5
  %v514 = vsel %vm500, %v512, %v513
  %v515 = vrot.slane %v33, 5
  %v516 = vrot.slane %v515, 4
  %v517 = vrot.slane %v34, 5
  %v518 = vsel %vm500, %v516, %v517
  %v519 = vrot.slane %v517, 4
  %v520 = vrot.slane %v35, 5
  %v521 = vsel %vm500, %v519, %v520
  %v522 = vrot.slane %v36, 5
  %v523 = vrot.slane %v522, 4
  %v524 = vrot.slane %v37, 5
  %v525 = vsel %vm500, %v523, %v524
  %v526 = vrot.slane %v524, 4
  %v527 = vrot.slane %v38, 5
  %v528 = vsel %vm500, %v526, %v527
  %v529 = vrot.slane %v39, 5
  %v530 = vrot.slane %v529, 4
  %v531 = vrot.slane %v40, 5
  %v532 = vsel %vm500, %v530, %v531
  %v533 = vrot.slane %v531, 4
  %v534 = vrot.slane %v41, 5
  %v535 = vsel %vm500, %v533, %v534
  %v536 = vrot.slane %v42, 5
  %v537 = vrot.slane %v536, 4
  %v538 = vrot.slane %v43, 5
  %v539 = vsel %vm500, %v537, %v538
  %v540 = vrot.slane %v538, 4
  %v541 = vrot.slane %v44, 5
  %v542 = vsel %vm500, %v540, %v541
  %v543 = vrot.slane %v45, 5
  %v544 = vrot.slane %v543, 4
  %v545 = vrot.slane %v46, 5
  %v546 = vsel %vm500, %v544, %v545
  %v547 = vrot.slane %v545, 4
  %v548 = vrot.slane %v47, 5
  %v549 = vsel %vm500, %v547, %v548
  %v550 = vrot.slane %v48, 5
  %v551 = vrot.slane %v550, 4
  %v552 = vrot.slane %v49, 5
  %v553 = vsel %vm500, %v551, %v552
  %v554 = vrot.slane %v552, 4
  %v555 = vrot.slane %v50, 5
  %v556 = vsel %vm500, %v554, %v555
  %s557 = scalar_lea.vmem %s2, 32
  %v558 = vld [vmem:[%s557] sm:$0xf]
  %v559 = vld [vmem:[%s557 + $0x4] sm:$0xf]
  %v560 = vld [vmem:[%s557 + $0x8] sm:$0xf]
  %v561 = vld [vmem:[%s557 + $0xc] sm:$0xf]
  %v562 = vunpack.c.l.b16 %v504
  %v563 = vunpack.c.l.b16 %v507
  %v564 = vunpack.c.l.b16 %v511
  %v565 = vunpack.c.l.b16 %v514
  %v566 = vunpack.c.l.b16 %v518
  %v567 = vunpack.c.l.b16 %v521
  %v568 = vunpack.c.l.b16 %v525
  %v569 = vunpack.c.l.b16 %v528
  %v570 = vunpack.c.l.b16 %v532
  %v571 = vunpack.c.l.b16 %v535
  %v572 = vunpack.c.l.b16 %v539
  %v573 = vunpack.c.l.b16 %v542
  %v574 = vunpack.c.l.b16 %v546
  %v575 = vunpack.c.l.b16 %v549
  %v576 = vunpack.c.l.b16 %v553
  %v577 = vunpack.c.l.b16 %v556
  %v578 = vpack.c.b16 %v563, %v562
  %v579 = vpack.c.b16 %v565, %v564
  %v580 = vpack.c.b16 %v567, %v566
  %v581 = vpack.c.b16 %v569, %v568
  %v582 = vpack.c.b16 %v571, %v570
  %v583 = vpack.c.b16 %v573, %v572
  %v584 = vpack.c.b16 %v575, %v574
  %v585 = vpack.c.b16 %v577, %v576
  %v590 = vunpack.c.l.b16 %v558
  %v591 = vunpack.c.l.b16 %v559
  %v592 = vunpack.c.l.b16 %v560
  %v593 = vunpack.c.l.b16 %v561
  %v594 = vpack.c.b16 %v591, %v590
  %v595 = vpack.c.b16 %v593, %v592
  %v599 = vsel %vm291, %v578, 0
  %v602 = vsel %vm291, %v579, 0
  %v605 = vsel %vm291, %v580, 0
  %v608 = vsel %vm291, %v581, 0
  %v611 = vsel %vm291, %v582, 0
  %v614 = vsel %vm291, %v583, 0
  %v617 = vsel %vm291, %v584, 0
  %v620 = vsel %vm291, %v585, 0
  %622 = vmatpush.bf16.msra.mxu0 0
  %623 = vmatpush.bf16.msra.mxu0 0
  %624 = vmatpush.bf16.msra.mxu0 0
  %625 = vmatpush.bf16.msra.mxu0 0
  %626 = vmatpush.bf16.msra.mxu0 0
  %627 = vmatpush.bf16.msra.mxu0 0
  %628 = vmatpush.bf16.msra.mxu0 %v595
  %629 = vmatpush.bf16.msra.mxu0 %v594
  %630 = vmatmul.bf16.gmra.mxu0 %v599
  %v631 = vpop.f32.mrf.mxu0
  %v632 = vadd.f32 0.0, %v631
  %v633 = vpop.f32.mrf.mxu0
  %v634 = vadd.f32 0.0, %v633
  %635 = vmatmul.bf16.gmra.mxu0 %v602
  %v636 = vpop.f32.mrf.mxu0
  %v637 = vadd.f32 0.0, %v636
  %v638 = vpop.f32.mrf.mxu0
  %v639 = vadd.f32 0.0, %v638
  %640 = vmatmul.bf16.gmra.mxu0 %v605
  %v641 = vpop.f32.mrf.mxu0
  %v642 = vadd.f32 0.0, %v641
  %v643 = vpop.f32.mrf.mxu0
  %v644 = vadd.f32 0.0, %v643
  %645 = vmatmul.bf16.gmra.mxu0 %v608
  %v646 = vpop.f32.mrf.mxu0
  %v647 = vadd.f32 0.0, %v646
  %v648 = vpop.f32.mrf.mxu0
  %v649 = vadd.f32 0.0, %v648
  %650 = vmatmul.bf16.gmra.mxu0 %v611
  %v651 = vpop.f32.mrf.mxu0
  %v652 = vadd.f32 0.0, %v651
  %v653 = vpop.f32.mrf.mxu0
  %v654 = vadd.f32 0.0, %v653
  %655 = vmatmul.bf16.gmra.mxu0 %v614
  %v656 = vpop.f32.mrf.mxu0
  %v657 = vadd.f32 0.0, %v656
  %v658 = vpop.f32.mrf.mxu0
  %v659 = vadd.f32 0.0, %v658
  %660 = vmatmul.bf16.gmra.mxu0 %v617
  %v661 = vpop.f32.mrf.mxu0
  %v662 = vadd.f32 0.0, %v661
  %v663 = vpop.f32.mrf.mxu0
  %v664 = vadd.f32 0.0, %v663
  %665 = vmatmul.bf16.gmra.mxu0 %v620
  %v666 = vpop.f32.mrf.mxu0
  %v667 = vadd.f32 0.0, %v666
  %v668 = vpop.f32.mrf.mxu0
  %v669 = vadd.f32 0.0, %v668
  %670 = vdwg.mxu0
  %v671 = vadd.f32 %v451, %v632
  %v672 = vadd.f32 %v453, %v634
  %v673 = vadd.f32 %v456, %v637
  %v674 = vadd.f32 %v458, %v639
  %v675 = vadd.f32 %v461, %v642
  %v676 = vadd.f32 %v463, %v644
  %v677 = vadd.f32 %v466, %v647
  %v678 = vadd.f32 %v468, %v649
  %v679 = vadd.f32 %v471, %v652
  %v680 = vadd.f32 %v473, %v654
  %v681 = vadd.f32 %v476, %v657
  %v682 = vadd.f32 %v478, %v659
  %v683 = vadd.f32 %v481, %v662
  %v684 = vadd.f32 %v483, %v664
  %v685 = vadd.f32 %v486, %v667
  %v686 = vadd.f32 %v488, %v669
  %v687 = vperm.slane %v26, 0
  %v688 = vadd.f32 %v671, %v687
  %v689 = vadd.f32 %v672, %v687
  %v690 = vadd.f32 %v673, %v687
  %v691 = vadd.f32 %v674, %v687
  %v692 = vadd.f32 %v675, %v687
  %v693 = vadd.f32 %v676, %v687
  %v694 = vadd.f32 %v677, %v687
  %v695 = vadd.f32 %v678, %v687
  %v696 = vadd.f32 %v679, %v687
  %v697 = vadd.f32 %v680, %v687
  %v698 = vadd.f32 %v681, %v687
  %v699 = vadd.f32 %v682, %v687
  %v700 = vadd.f32 %v683, %v687
  %v701 = vadd.f32 %v684, %v687
  %v702 = vadd.f32 %v685, %v687
  %v703 = vadd.f32 %v686, %v687
  %v704 = vmax.f32 %v688, 0.0
  %v705 = vmax.f32 %v689, 0.0
  %v706 = vmax.f32 %v690, 0.0
  %v707 = vmax.f32 %v691, 0.0
  %v708 = vmax.f32 %v692, 0.0
  %v709 = vmax.f32 %v693, 0.0
  %v710 = vmax.f32 %v694, 0.0
  %v711 = vmax.f32 %v695, 0.0
  %v712 = vmax.f32 %v696, 0.0
  %v713 = vmax.f32 %v697, 0.0
  %v714 = vmax.f32 %v698, 0.0
  %v715 = vmax.f32 %v699, 0.0
  %v716 = vmax.f32 %v700, 0.0
  %v717 = vmax.f32 %v701, 0.0
  %v718 = vmax.f32 %v702, 0.0
  %v719 = vmax.f32 %v703, 0.0
  %v720 = vmul.f32 %v704, %v24
  %v721 = vmul.f32 %v705, %v25
  %v722 = vmul.f32 %v706, %v24
  %v723 = vmul.f32 %v707, %v25
  %v724 = vmul.f32 %v708, %v24
  %v725 = vmul.f32 %v709, %v25
  %v726 = vmul.f32 %v710, %v24
  %v727 = vmul.f32 %v711, %v25
  %v728 = vmul.f32 %v712, %v24
  %v729 = vmul.f32 %v713, %v25
  %v730 = vmul.f32 %v714, %v24
  %v731 = vmul.f32 %v715, %v25
  %v732 = vmul.f32 %v716, %v24
  %v733 = vmul.f32 %v717, %v25
  %v734 = vmul.f32 %v718, %v24
  %v735 = vmul.f32 %v719, %v25
  %v736 = vmax.f32 %v720, %v721
  %v737 = vrot.slane %v736, 4
  %v738 = vmax.f32 %v736, %v737
  %v739 = vrot.slane %v738, 2
  %v740 = vmax.f32 %v738, %v739
  %v741 = vrot.slane %v740, 1
  %v742 = vmax.f32 %v740, %v741
  %v743 = vmax.f32 %v722, %v723
  %v744 = vrot.slane %v743, 4
  %v745 = vmax.f32 %v743, %v744
  %v746 = vrot.slane %v745, 2
  %v747 = vmax.f32 %v745, %v746
  %v748 = vrot.slane %v747, 1
  %v749 = vmax.f32 %v747, %v748
  %v750 = vmax.f32 %v724, %v725
  %v751 = vrot.slane %v750, 4
  %v752 = vmax.f32 %v750, %v751
  %v753 = vrot.slane %v752, 2
  %v754 = vmax.f32 %v752, %v753
  %v755 = vrot.slane %v754, 1
  %v756 = vmax.f32 %v754, %v755
  %v757 = vmax.f32 %v726, %v727
  %v758 = vrot.slane %v757, 4
  %v759 = vmax.f32 %v757, %v758
  %v760 = vrot.slane %v759, 2
  %v761 = vmax.f32 %v759, %v760
  %v762 = vrot.slane %v761, 1
  %v763 = vmax.f32 %v761, %v762
  %v764 = vmax.f32 %v728, %v729
  %v765 = vrot.slane %v764, 4
  %v766 = vmax.f32 %v764, %v765
  %v767 = vrot.slane %v766, 2
  %v768 = vmax.f32 %v766, %v767
  %v769 = vrot.slane %v768, 1
  %v770 = vmax.f32 %v768, %v769
  %v771 = vmax.f32 %v730, %v731
  %v772 = vrot.slane %v771, 4
  %v773 = vmax.f32 %v771, %v772
  %v774 = vrot.slane %v773, 2
  %v775 = vmax.f32 %v773, %v774
  %v776 = vrot.slane %v775, 1
  %v777 = vmax.f32 %v775, %v776
  %v778 = vmax.f32 %v732, %v733
  %v779 = vrot.slane %v778, 4
  %v780 = vmax.f32 %v778, %v779
  %v781 = vrot.slane %v780, 2
  %v782 = vmax.f32 %v780, %v781
  %v783 = vrot.slane %v782, 1
  %v784 = vmax.f32 %v782, %v783
  %v785 = vmax.f32 %v734, %v735
  %v786 = vrot.slane %v785, 4
  %v787 = vmax.f32 %v785, %v786
  %v788 = vrot.slane %v787, 2
  %v789 = vmax.f32 %v787, %v788
  %v790 = vrot.slane %v789, 1
  %v791 = vmax.f32 %v789, %v790
  %vm800 = vcmask 1041409
  %v801 = vsel %vm800, %v749, %v742
  %vm802 = vcmask 1042434
  %v803 = vsel %vm802, %v756, %v801
  %vm804 = vcmask 1043459
  %v805 = vsel %vm804, %v763, %v803
  %vm806 = vcmask 1044484
  %v807 = vsel %vm806, %v770, %v805
  %vm808 = vcmask 1045509
  %v809 = vsel %vm808, %v777, %v807
  %vm810 = vcmask 1046534
  %v811 = vsel %vm810, %v784, %v809
  %vm812 = vcmask 1047559
  %v813 = vsel %vm812, %v791, %v811
  %815 = vst [vmem:[%s6] sm:$0xff] %v813
  %v816 = vld [vmem:[%s1] sm:$0xf]
  %v817 = vld [vmem:[%s1 + $0x4] sm:$0xf]
  %v818 = vld [vmem:[%s1 + $0x8] sm:$0x1]
  %v819 = vld [vmem:[%s1 + $0xc] sm:$0xf]
  %v820 = vld [vmem:[%s1 + $0x10] sm:$0xf]
  %v821 = vld [vmem:[%s1 + $0x14] sm:$0x1]
  %v822 = vld [vmem:[%s1 + $0x18] sm:$0xf]
  %v823 = vld [vmem:[%s1 + $0x1c] sm:$0xf]
  %v824 = vld [vmem:[%s1 + $0x20] sm:$0x1]
  %v825 = vld [vmem:[%s1 + $0x24] sm:$0xf]
  %v826 = vld [vmem:[%s1 + $0x28] sm:$0xf]
  %v827 = vld [vmem:[%s1 + $0x2c] sm:$0x1]
  %v828 = vld [vmem:[%s1 + $0x30] sm:$0xf]
  %v829 = vld [vmem:[%s1 + $0x34] sm:$0xf]
  %v830 = vld [vmem:[%s1 + $0x38] sm:$0x1]
  %v831 = vld [vmem:[%s1 + $0x3c] sm:$0xf]
  %v832 = vld [vmem:[%s1 + $0x40] sm:$0xf]
  %v833 = vld [vmem:[%s1 + $0x44] sm:$0x1]
  %v834 = vld [vmem:[%s1 + $0x48] sm:$0xf]
  %v835 = vld [vmem:[%s1 + $0x4c] sm:$0xf]
  %v836 = vld [vmem:[%s1 + $0x50] sm:$0x1]
  %v837 = vld [vmem:[%s1 + $0x54] sm:$0xf]
  %v838 = vld [vmem:[%s1 + $0x58] sm:$0xf]
  %v839 = vld [vmem:[%s1 + $0x5c] sm:$0x1]
  %v840 = vld [vmem:[%s3] sm:$0xf]
  %v841 = vld [vmem:[%s3 + $0x4] sm:$0xf]
  %v842 = vld [vmem:[%s3 + $0x8] sm:$0xf]
  %v843 = vld [vmem:[%s3 + $0xc] sm:$0xf]
  %v845 = vshrl.u32 %v816, 16
  %v847 = vrot.slane %v845, 4
  %v848 = vshll.u32 %v816, 16
  %v850 = vrot.slane %v848, 5
  %v851 = vor.u32 %v847, %v850
  %v852 = vrot.slane %v851, 4
  %v854 = vshll.u32 %v817, 16
  %v856 = vrot.slane %v854, 5
  %v857 = vsel %vm57, %v852, %v856
  %v858 = vshrl.u32 %v817, 16
  %v860 = vrot.slane %v858, 4
  %v861 = vor.u32 %v860, %v856
  %v862 = vrot.slane %v861, 4
  %v864 = vshll.u32 %v818, 16
  %v866 = vrot.slane %v864, 5
  %v867 = vsel %vm57, %v862, %v866
  %v869 = vshrl.u32 %v819, 16
  %v871 = vrot.slane %v869, 4
  %v872 = vshll.u32 %v819, 16
  %v874 = vrot.slane %v872, 5
  %v875 = vor.u32 %v871, %v874
  %v876 = vrot.slane %v875, 4
  %v878 = vshll.u32 %v820, 16
  %v880 = vrot.slane %v878, 5
  %v881 = vsel %vm57, %v876, %v880
  %v882 = vshrl.u32 %v820, 16
  %v884 = vrot.slane %v882, 4
  %v885 = vor.u32 %v884, %v880
  %v886 = vrot.slane %v885, 4
  %v888 = vshll.u32 %v821, 16
  %v890 = vrot.slane %v888, 5
  %v891 = vsel %vm57, %v886, %v890
  %v893 = vshrl.u32 %v822, 16
  %v895 = vrot.slane %v893, 4
  %v896 = vshll.u32 %v822, 16
  %v898 = vrot.slane %v896, 5
  %v899 = vor.u32 %v895, %v898
  %v900 = vrot.slane %v899, 4
  %v902 = vshll.u32 %v823, 16
  %v904 = vrot.slane %v902, 5
  %v905 = vsel %vm57, %v900, %v904
  %v906 = vshrl.u32 %v823, 16
  %v908 = vrot.slane %v906, 4
  %v909 = vor.u32 %v908, %v904
  %v910 = vrot.slane %v909, 4
  %v912 = vshll.u32 %v824, 16
  %v914 = vrot.slane %v912, 5
  %v915 = vsel %vm57, %v910, %v914
  %v917 = vshrl.u32 %v825, 16
  %v919 = vrot.slane %v917, 4
  %v920 = vshll.u32 %v825, 16
  %v922 = vrot.slane %v920, 5
  %v923 = vor.u32 %v919, %v922
  %v924 = vrot.slane %v923, 4
  %v926 = vshll.u32 %v826, 16
  %v928 = vrot.slane %v926, 5
  %v929 = vsel %vm57, %v924, %v928
  %v930 = vshrl.u32 %v826, 16
  %v932 = vrot.slane %v930, 4
  %v933 = vor.u32 %v932, %v928
  %v934 = vrot.slane %v933, 4
  %v936 = vshll.u32 %v827, 16
  %v938 = vrot.slane %v936, 5
  %v939 = vsel %vm57, %v934, %v938
  %v941 = vshrl.u32 %v828, 16
  %v943 = vrot.slane %v941, 4
  %v944 = vshll.u32 %v828, 16
  %v946 = vrot.slane %v944, 5
  %v947 = vor.u32 %v943, %v946
  %v948 = vrot.slane %v947, 4
  %v950 = vshll.u32 %v829, 16
  %v952 = vrot.slane %v950, 5
  %v953 = vsel %vm57, %v948, %v952
  %v954 = vshrl.u32 %v829, 16
  %v956 = vrot.slane %v954, 4
  %v957 = vor.u32 %v956, %v952
  %v958 = vrot.slane %v957, 4
  %v960 = vshll.u32 %v830, 16
  %v962 = vrot.slane %v960, 5
  %v963 = vsel %vm57, %v958, %v962
  %v965 = vshrl.u32 %v831, 16
  %v967 = vrot.slane %v965, 4
  %v968 = vshll.u32 %v831, 16
  %v970 = vrot.slane %v968, 5
  %v971 = vor.u32 %v967, %v970
  %v972 = vrot.slane %v971, 4
  %v974 = vshll.u32 %v832, 16
  %v976 = vrot.slane %v974, 5
  %v977 = vsel %vm57, %v972, %v976
  %v978 = vshrl.u32 %v832, 16
  %v980 = vrot.slane %v978, 4
  %v981 = vor.u32 %v980, %v976
  %v982 = vrot.slane %v981, 4
  %v984 = vshll.u32 %v833, 16
  %v986 = vrot.slane %v984, 5
  %v987 = vsel %vm57, %v982, %v986
  %v989 = vshrl.u32 %v834, 16
  %v991 = vrot.slane %v989, 4
  %v992 = vshll.u32 %v834, 16
  %v994 = vrot.slane %v992, 5
  %v995 = vor.u32 %v991, %v994
  %v996 = vrot.slane %v995, 4
  %v998 = vshll.u32 %v835, 16
  %v1000 = vrot.slane %v998, 5
  %v1001 = vsel %vm57, %v996, %v1000
  %v1002 = vshrl.u32 %v835, 16
  %v1004 = vrot.slane %v1002, 4
  %v1005 = vor.u32 %v1004, %v1000
  %v1006 = vrot.slane %v1005, 4
  %v1008 = vshll.u32 %v836, 16
  %v1010 = vrot.slane %v1008, 5
  %v1011 = vsel %vm57, %v1006, %v1010
  %v1013 = vshrl.u32 %v837, 16
  %v1015 = vrot.slane %v1013, 4
  %v1016 = vshll.u32 %v837, 16
  %v1018 = vrot.slane %v1016, 5
  %v1019 = vor.u32 %v1015, %v1018
  %v1020 = vrot.slane %v1019, 4
  %v1022 = vshll.u32 %v838, 16
  %v1024 = vrot.slane %v1022, 5
  %v1025 = vsel %vm57, %v1020, %v1024
  %v1026 = vshrl.u32 %v838, 16
  %v1028 = vrot.slane %v1026, 4
  %v1029 = vor.u32 %v1028, %v1024
  %v1030 = vrot.slane %v1029, 4
  %v1032 = vshll.u32 %v839, 16
  %v1034 = vrot.slane %v1032, 5
  %v1035 = vsel %vm57, %v1030, %v1034
  %s1036 = scalar_lea.vmem %s3, 16
  %v1037 = vld [vmem:[%s1036] sm:$0xf]
  %v1038 = vld [vmem:[%s1036 + $0x4] sm:$0xf]
  %v1039 = vld [vmem:[%s1036 + $0x8] sm:$0xf]
  %v1040 = vld [vmem:[%s1036 + $0xc] sm:$0xf]
  %v1041 = vunpack.c.l.b16 %v857
  %v1042 = vunpack.c.l.b16 %v867
  %v1043 = vunpack.c.l.b16 %v881
  %v1044 = vunpack.c.l.b16 %v891
  %v1045 = vunpack.c.l.b16 %v905
  %v1046 = vunpack.c.l.b16 %v915
  %v1047 = vunpack.c.l.b16 %v929
  %v1048 = vunpack.c.l.b16 %v939
  %v1049 = vunpack.c.l.b16 %v953
  %v1050 = vunpack.c.l.b16 %v963
  %v1051 = vunpack.c.l.b16 %v977
  %v1052 = vunpack.c.l.b16 %v987
  %v1053 = vunpack.c.l.b16 %v1001
  %v1054 = vunpack.c.l.b16 %v1011
  %v1055 = vunpack.c.l.b16 %v1025
  %v1056 = vunpack.c.l.b16 %v1035
  %v1057 = vpack.c.b16 %v1042, %v1041
  %v1058 = vpack.c.b16 %v1044, %v1043
  %v1059 = vpack.c.b16 %v1046, %v1045
  %v1060 = vpack.c.b16 %v1048, %v1047
  %v1061 = vpack.c.b16 %v1050, %v1049
  %v1062 = vpack.c.b16 %v1052, %v1051
  %v1063 = vpack.c.b16 %v1054, %v1053
  %v1064 = vpack.c.b16 %v1056, %v1055
  %v1069 = vunpack.c.l.b16 %v1037
  %v1070 = vunpack.c.l.b16 %v1038
  %v1071 = vunpack.c.l.b16 %v1039
  %v1072 = vunpack.c.l.b16 %v1040
  %v1073 = vpack.c.b16 %v1070, %v1069
  %v1074 = vpack.c.b16 %v1072, %v1071
  %v1078 = vsel %vm291, %v1057, 0
  %v1081 = vsel %vm291, %v1058, 0
  %v1084 = vsel %vm291, %v1059, 0
  %v1087 = vsel %vm291, %v1060, 0
  %v1090 = vsel %vm291, %v1061, 0
  %v1093 = vsel %vm291, %v1062, 0
  %v1096 = vsel %vm291, %v1063, 0
  %v1099 = vsel %vm291, %v1064, 0
  %1101 = vmatpush.bf16.msra.mxu0 0
  %1102 = vmatpush.bf16.msra.mxu0 0
  %1103 = vmatpush.bf16.msra.mxu0 0
  %1104 = vmatpush.bf16.msra.mxu0 0
  %1105 = vmatpush.bf16.msra.mxu0 0
  %1106 = vmatpush.bf16.msra.mxu0 0
  %1107 = vmatpush.bf16.msra.mxu0 %v1074
  %1108 = vmatpush.bf16.msra.mxu0 %v1073
  %1109 = vmatmul.bf16.gmra.mxu0 %v1078
  %v1110 = vpop.f32.mrf.mxu0
  %v1111 = vadd.f32 0.0, %v1110
  %v1112 = vpop.f32.mrf.mxu0
  %v1113 = vadd.f32 0.0, %v1112
  %1114 = vmatmul.bf16.gmra.mxu0 %v1081
  %v1115 = vpop.f32.mrf.mxu0
  %v1116 = vadd.f32 0.0, %v1115
  %v1117 = vpop.f32.mrf.mxu0
  %v1118 = vadd.f32 0.0, %v1117
  %1119 = vmatmul.bf16.gmra.mxu0 %v1084
  %v1120 = vpop.f32.mrf.mxu0
  %v1121 = vadd.f32 0.0, %v1120
  %v1122 = vpop.f32.mrf.mxu0
  %v1123 = vadd.f32 0.0, %v1122
  %1124 = vmatmul.bf16.gmra.mxu0 %v1087
  %v1125 = vpop.f32.mrf.mxu0
  %v1126 = vadd.f32 0.0, %v1125
  %v1127 = vpop.f32.mrf.mxu0
  %v1128 = vadd.f32 0.0, %v1127
  %1129 = vmatmul.bf16.gmra.mxu0 %v1090
  %v1130 = vpop.f32.mrf.mxu0
  %v1131 = vadd.f32 0.0, %v1130
  %v1132 = vpop.f32.mrf.mxu0
  %v1133 = vadd.f32 0.0, %v1132
  %1134 = vmatmul.bf16.gmra.mxu0 %v1093
  %v1135 = vpop.f32.mrf.mxu0
  %v1136 = vadd.f32 0.0, %v1135
  %v1137 = vpop.f32.mrf.mxu0
  %v1138 = vadd.f32 0.0, %v1137
  %1139 = vmatmul.bf16.gmra.mxu0 %v1096
  %v1140 = vpop.f32.mrf.mxu0
  %v1141 = vadd.f32 0.0, %v1140
  %v1142 = vpop.f32.mrf.mxu0
  %v1143 = vadd.f32 0.0, %v1142
  %1144 = vmatmul.bf16.gmra.mxu0 %v1099
  %v1145 = vpop.f32.mrf.mxu0
  %v1146 = vadd.f32 0.0, %v1145
  %v1147 = vpop.f32.mrf.mxu0
  %v1148 = vadd.f32 0.0, %v1147
  %1149 = vdwg.mxu0
  %v1166 = vunpack.c.l.b16 %v816
  %v1167 = vunpack.c.l.b16 %v817
  %v1168 = vunpack.c.l.b16 %v819
  %v1169 = vunpack.c.l.b16 %v820
  %v1170 = vunpack.c.l.b16 %v822
  %v1171 = vunpack.c.l.b16 %v823
  %v1172 = vunpack.c.l.b16 %v825
  %v1173 = vunpack.c.l.b16 %v826
  %v1174 = vunpack.c.l.b16 %v828
  %v1175 = vunpack.c.l.b16 %v829
  %v1176 = vunpack.c.l.b16 %v831
  %v1177 = vunpack.c.l.b16 %v832
  %v1178 = vunpack.c.l.b16 %v834
  %v1179 = vunpack.c.l.b16 %v835
  %v1180 = vunpack.c.l.b16 %v837
  %v1181 = vunpack.c.l.b16 %v838
  %v1182 = vpack.c.b16 %v1167, %v1166
  %v1183 = vpack.c.b16 %v1169, %v1168
  %v1184 = vpack.c.b16 %v1171, %v1170
  %v1185 = vpack.c.b16 %v1173, %v1172
  %v1186 = vpack.c.b16 %v1175, %v1174
  %v1187 = vpack.c.b16 %v1177, %v1176
  %v1188 = vpack.c.b16 %v1179, %v1178
  %v1189 = vpack.c.b16 %v1181, %v1180
  %v1194 = vunpack.c.l.b16 %v840
  %v1195 = vunpack.c.l.b16 %v841
  %v1196 = vunpack.c.l.b16 %v842
  %v1197 = vunpack.c.l.b16 %v843
  %v1198 = vpack.c.b16 %v1195, %v1194
  %v1199 = vpack.c.b16 %v1197, %v1196
  %v1203 = vsel %vm291, %v1182, 0
  %v1206 = vsel %vm291, %v1183, 0
  %v1209 = vsel %vm291, %v1184, 0
  %v1212 = vsel %vm291, %v1185, 0
  %v1215 = vsel %vm291, %v1186, 0
  %v1218 = vsel %vm291, %v1187, 0
  %v1221 = vsel %vm291, %v1188, 0
  %v1224 = vsel %vm291, %v1189, 0
  %1226 = vmatpush.bf16.msra.mxu0 0
  %1227 = vmatpush.bf16.msra.mxu0 0
  %1228 = vmatpush.bf16.msra.mxu0 0
  %1229 = vmatpush.bf16.msra.mxu0 0
  %1230 = vmatpush.bf16.msra.mxu0 0
  %1231 = vmatpush.bf16.msra.mxu0 0
  %1232 = vmatpush.bf16.msra.mxu0 %v1199
  %1233 = vmatpush.bf16.msra.mxu0 %v1198
  %1234 = vmatmul.bf16.gmra.mxu0 %v1203
  %v1235 = vpop.f32.mrf.mxu0
  %v1236 = vadd.f32 %v1111, %v1235
  %v1237 = vpop.f32.mrf.mxu0
  %v1238 = vadd.f32 %v1113, %v1237
  %1239 = vmatmul.bf16.gmra.mxu0 %v1206
  %v1240 = vpop.f32.mrf.mxu0
  %v1241 = vadd.f32 %v1116, %v1240
  %v1242 = vpop.f32.mrf.mxu0
  %v1243 = vadd.f32 %v1118, %v1242
  %1244 = vmatmul.bf16.gmra.mxu0 %v1209
  %v1245 = vpop.f32.mrf.mxu0
  %v1246 = vadd.f32 %v1121, %v1245
  %v1247 = vpop.f32.mrf.mxu0
  %v1248 = vadd.f32 %v1123, %v1247
  %1249 = vmatmul.bf16.gmra.mxu0 %v1212
  %v1250 = vpop.f32.mrf.mxu0
  %v1251 = vadd.f32 %v1126, %v1250
  %v1252 = vpop.f32.mrf.mxu0
  %v1253 = vadd.f32 %v1128, %v1252
  %1254 = vmatmul.bf16.gmra.mxu0 %v1215
  %v1255 = vpop.f32.mrf.mxu0
  %v1256 = vadd.f32 %v1131, %v1255
  %v1257 = vpop.f32.mrf.mxu0
  %v1258 = vadd.f32 %v1133, %v1257
  %1259 = vmatmul.bf16.gmra.mxu0 %v1218
  %v1260 = vpop.f32.mrf.mxu0
  %v1261 = vadd.f32 %v1136, %v1260
  %v1262 = vpop.f32.mrf.mxu0
  %v1263 = vadd.f32 %v1138, %v1262
  %1264 = vmatmul.bf16.gmra.mxu0 %v1221
  %v1265 = vpop.f32.mrf.mxu0
  %v1266 = vadd.f32 %v1141, %v1265
  %v1267 = vpop.f32.mrf.mxu0
  %v1268 = vadd.f32 %v1143, %v1267
  %1269 = vmatmul.bf16.gmra.mxu0 %v1224
  %v1270 = vpop.f32.mrf.mxu0
  %v1271 = vadd.f32 %v1146, %v1270
  %v1272 = vpop.f32.mrf.mxu0
  %v1273 = vadd.f32 %v1148, %v1272
  %1274 = vdwg.mxu0
  %v1283 = vrot.slane %v816, 5
  %v1284 = vrot.slane %v1283, 4
  %v1285 = vrot.slane %v817, 5
  %v1286 = vsel %vm500, %v1284, %v1285
  %v1287 = vrot.slane %v1285, 4
  %v1288 = vrot.slane %v818, 5
  %v1289 = vsel %vm500, %v1287, %v1288
  %v1290 = vrot.slane %v819, 5
  %v1291 = vrot.slane %v1290, 4
  %v1292 = vrot.slane %v820, 5
  %v1293 = vsel %vm500, %v1291, %v1292
  %v1294 = vrot.slane %v1292, 4
  %v1295 = vrot.slane %v821, 5
  %v1296 = vsel %vm500, %v1294, %v1295
  %v1297 = vrot.slane %v822, 5
  %v1298 = vrot.slane %v1297, 4
  %v1299 = vrot.slane %v823, 5
  %v1300 = vsel %vm500, %v1298, %v1299
  %v1301 = vrot.slane %v1299, 4
  %v1302 = vrot.slane %v824, 5
  %v1303 = vsel %vm500, %v1301, %v1302
  %v1304 = vrot.slane %v825, 5
  %v1305 = vrot.slane %v1304, 4
  %v1306 = vrot.slane %v826, 5
  %v1307 = vsel %vm500, %v1305, %v1306
  %v1308 = vrot.slane %v1306, 4
  %v1309 = vrot.slane %v827, 5
  %v1310 = vsel %vm500, %v1308, %v1309
  %v1311 = vrot.slane %v828, 5
  %v1312 = vrot.slane %v1311, 4
  %v1313 = vrot.slane %v829, 5
  %v1314 = vsel %vm500, %v1312, %v1313
  %v1315 = vrot.slane %v1313, 4
  %v1316 = vrot.slane %v830, 5
  %v1317 = vsel %vm500, %v1315, %v1316
  %v1318 = vrot.slane %v831, 5
  %v1319 = vrot.slane %v1318, 4
  %v1320 = vrot.slane %v832, 5
  %v1321 = vsel %vm500, %v1319, %v1320
  %v1322 = vrot.slane %v1320, 4
  %v1323 = vrot.slane %v833, 5
  %v1324 = vsel %vm500, %v1322, %v1323
  %v1325 = vrot.slane %v834, 5
  %v1326 = vrot.slane %v1325, 4
  %v1327 = vrot.slane %v835, 5
  %v1328 = vsel %vm500, %v1326, %v1327
  %v1329 = vrot.slane %v1327, 4
  %v1330 = vrot.slane %v836, 5
  %v1331 = vsel %vm500, %v1329, %v1330
  %v1332 = vrot.slane %v837, 5
  %v1333 = vrot.slane %v1332, 4
  %v1334 = vrot.slane %v838, 5
  %v1335 = vsel %vm500, %v1333, %v1334
  %v1336 = vrot.slane %v1334, 4
  %v1337 = vrot.slane %v839, 5
  %v1338 = vsel %vm500, %v1336, %v1337
  %s1339 = scalar_lea.vmem %s3, 32
  %v1340 = vld [vmem:[%s1339] sm:$0xf]
  %v1341 = vld [vmem:[%s1339 + $0x4] sm:$0xf]
  %v1342 = vld [vmem:[%s1339 + $0x8] sm:$0xf]
  %v1343 = vld [vmem:[%s1339 + $0xc] sm:$0xf]
  %v1344 = vunpack.c.l.b16 %v1286
  %v1345 = vunpack.c.l.b16 %v1289
  %v1346 = vunpack.c.l.b16 %v1293
  %v1347 = vunpack.c.l.b16 %v1296
  %v1348 = vunpack.c.l.b16 %v1300
  %v1349 = vunpack.c.l.b16 %v1303
  %v1350 = vunpack.c.l.b16 %v1307
  %v1351 = vunpack.c.l.b16 %v1310
  %v1352 = vunpack.c.l.b16 %v1314
  %v1353 = vunpack.c.l.b16 %v1317
  %v1354 = vunpack.c.l.b16 %v1321
  %v1355 = vunpack.c.l.b16 %v1324
  %v1356 = vunpack.c.l.b16 %v1328
  %v1357 = vunpack.c.l.b16 %v1331
  %v1358 = vunpack.c.l.b16 %v1335
  %v1359 = vunpack.c.l.b16 %v1338
  %v1360 = vpack.c.b16 %v1345, %v1344
  %v1361 = vpack.c.b16 %v1347, %v1346
  %v1362 = vpack.c.b16 %v1349, %v1348
  %v1363 = vpack.c.b16 %v1351, %v1350
  %v1364 = vpack.c.b16 %v1353, %v1352
  %v1365 = vpack.c.b16 %v1355, %v1354
  %v1366 = vpack.c.b16 %v1357, %v1356
  %v1367 = vpack.c.b16 %v1359, %v1358
  %v1372 = vunpack.c.l.b16 %v1340
  %v1373 = vunpack.c.l.b16 %v1341
  %v1374 = vunpack.c.l.b16 %v1342
  %v1375 = vunpack.c.l.b16 %v1343
  %v1376 = vpack.c.b16 %v1373, %v1372
  %v1377 = vpack.c.b16 %v1375, %v1374
  %v1381 = vsel %vm291, %v1360, 0
  %v1384 = vsel %vm291, %v1361, 0
  %v1387 = vsel %vm291, %v1362, 0
  %v1390 = vsel %vm291, %v1363, 0
  %v1393 = vsel %vm291, %v1364, 0
  %v1396 = vsel %vm291, %v1365, 0
  %v1399 = vsel %vm291, %v1366, 0
  %v1402 = vsel %vm291, %v1367, 0
  %1404 = vmatpush.bf16.msra.mxu0 0
  %1405 = vmatpush.bf16.msra.mxu0 0
  %1406 = vmatpush.bf16.msra.mxu0 0
  %1407 = vmatpush.bf16.msra.mxu0 0
  %1408 = vmatpush.bf16.msra.mxu0 0
  %1409 = vmatpush.bf16.msra.mxu0 0
  %1410 = vmatpush.bf16.msra.mxu0 %v1377
  %1411 = vmatpush.bf16.msra.mxu0 %v1376
  %1412 = vmatmul.bf16.gmra.mxu0 %v1381
  %v1413 = vpop.f32.mrf.mxu0
  %v1414 = vadd.f32 0.0, %v1413
  %v1415 = vpop.f32.mrf.mxu0
  %v1416 = vadd.f32 0.0, %v1415
  %1417 = vmatmul.bf16.gmra.mxu0 %v1384
  %v1418 = vpop.f32.mrf.mxu0
  %v1419 = vadd.f32 0.0, %v1418
  %v1420 = vpop.f32.mrf.mxu0
  %v1421 = vadd.f32 0.0, %v1420
  %1422 = vmatmul.bf16.gmra.mxu0 %v1387
  %v1423 = vpop.f32.mrf.mxu0
  %v1424 = vadd.f32 0.0, %v1423
  %v1425 = vpop.f32.mrf.mxu0
  %v1426 = vadd.f32 0.0, %v1425
  %1427 = vmatmul.bf16.gmra.mxu0 %v1390
  %v1428 = vpop.f32.mrf.mxu0
  %v1429 = vadd.f32 0.0, %v1428
  %v1430 = vpop.f32.mrf.mxu0
  %v1431 = vadd.f32 0.0, %v1430
  %1432 = vmatmul.bf16.gmra.mxu0 %v1393
  %v1433 = vpop.f32.mrf.mxu0
  %v1434 = vadd.f32 0.0, %v1433
  %v1435 = vpop.f32.mrf.mxu0
  %v1436 = vadd.f32 0.0, %v1435
  %1437 = vmatmul.bf16.gmra.mxu0 %v1396
  %v1438 = vpop.f32.mrf.mxu0
  %v1439 = vadd.f32 0.0, %v1438
  %v1440 = vpop.f32.mrf.mxu0
  %v1441 = vadd.f32 0.0, %v1440
  %1442 = vmatmul.bf16.gmra.mxu0 %v1399
  %v1443 = vpop.f32.mrf.mxu0
  %v1444 = vadd.f32 0.0, %v1443
  %v1445 = vpop.f32.mrf.mxu0
  %v1446 = vadd.f32 0.0, %v1445
  %1447 = vmatmul.bf16.gmra.mxu0 %v1402
  %v1448 = vpop.f32.mrf.mxu0
  %v1449 = vadd.f32 0.0, %v1448
  %v1450 = vpop.f32.mrf.mxu0
  %v1451 = vadd.f32 0.0, %v1450
  %1452 = vdwg.mxu0
  %v1453 = vadd.f32 %v1236, %v1414
  %v1454 = vadd.f32 %v1238, %v1416
  %v1455 = vadd.f32 %v1241, %v1419
  %v1456 = vadd.f32 %v1243, %v1421
  %v1457 = vadd.f32 %v1246, %v1424
  %v1458 = vadd.f32 %v1248, %v1426
  %v1459 = vadd.f32 %v1251, %v1429
  %v1460 = vadd.f32 %v1253, %v1431
  %v1461 = vadd.f32 %v1256, %v1434
  %v1462 = vadd.f32 %v1258, %v1436
  %v1463 = vadd.f32 %v1261, %v1439
  %v1464 = vadd.f32 %v1263, %v1441
  %v1465 = vadd.f32 %v1266, %v1444
  %v1466 = vadd.f32 %v1268, %v1446
  %v1467 = vadd.f32 %v1271, %v1449
  %v1468 = vadd.f32 %v1273, %v1451
  %v1469 = vperm.slane %v26, 1
  %v1470 = vadd.f32 %v1453, %v1469
  %v1471 = vadd.f32 %v1454, %v1469
  %v1472 = vadd.f32 %v1455, %v1469
  %v1473 = vadd.f32 %v1456, %v1469
  %v1474 = vadd.f32 %v1457, %v1469
  %v1475 = vadd.f32 %v1458, %v1469
  %v1476 = vadd.f32 %v1459, %v1469
  %v1477 = vadd.f32 %v1460, %v1469
  %v1478 = vadd.f32 %v1461, %v1469
  %v1479 = vadd.f32 %v1462, %v1469
  %v1480 = vadd.f32 %v1463, %v1469
  %v1481 = vadd.f32 %v1464, %v1469
  %v1482 = vadd.f32 %v1465, %v1469
  %v1483 = vadd.f32 %v1466, %v1469
  %v1484 = vadd.f32 %v1467, %v1469
  %v1485 = vadd.f32 %v1468, %v1469
  %v1486 = vmax.f32 %v1470, 0.0
  %v1487 = vmax.f32 %v1471, 0.0
  %v1488 = vmax.f32 %v1472, 0.0
  %v1489 = vmax.f32 %v1473, 0.0
  %v1490 = vmax.f32 %v1474, 0.0
  %v1491 = vmax.f32 %v1475, 0.0
  %v1492 = vmax.f32 %v1476, 0.0
  %v1493 = vmax.f32 %v1477, 0.0
  %v1494 = vmax.f32 %v1478, 0.0
  %v1495 = vmax.f32 %v1479, 0.0
  %v1496 = vmax.f32 %v1480, 0.0
  %v1497 = vmax.f32 %v1481, 0.0
  %v1498 = vmax.f32 %v1482, 0.0
  %v1499 = vmax.f32 %v1483, 0.0
  %v1500 = vmax.f32 %v1484, 0.0
  %v1501 = vmax.f32 %v1485, 0.0
  %v1502 = vmul.f32 %v1486, %v24
  %v1503 = vmul.f32 %v1487, %v25
  %v1504 = vmul.f32 %v1488, %v24
  %v1505 = vmul.f32 %v1489, %v25
  %v1506 = vmul.f32 %v1490, %v24
  %v1507 = vmul.f32 %v1491, %v25
  %v1508 = vmul.f32 %v1492, %v24
  %v1509 = vmul.f32 %v1493, %v25
  %v1510 = vmul.f32 %v1494, %v24
  %v1511 = vmul.f32 %v1495, %v25
  %v1512 = vmul.f32 %v1496, %v24
  %v1513 = vmul.f32 %v1497, %v25
  %v1514 = vmul.f32 %v1498, %v24
  %v1515 = vmul.f32 %v1499, %v25
  %v1516 = vmul.f32 %v1500, %v24
  %v1517 = vmul.f32 %v1501, %v25
  %v1518 = vmax.f32 %v1502, %v1503
  %v1519 = vrot.slane %v1518, 4
  %v1520 = vmax.f32 %v1518, %v1519
  %v1521 = vrot.slane %v1520, 2
  %v1522 = vmax.f32 %v1520, %v1521
  %v1523 = vrot.slane %v1522, 1
  %v1524 = vmax.f32 %v1522, %v1523
  %v1525 = vmax.f32 %v1504, %v1505
  %v1526 = vrot.slane %v1525, 4
  %v1527 = vmax.f32 %v1525, %v1526
  %v1528 = vrot.slane %v1527, 2
  %v1529 = vmax.f32 %v1527, %v1528
  %v1530 = vrot.slane %v1529, 1
  %v1531 = vmax.f32 %v1529, %v1530
  %v1532 = vmax.f32 %v1506, %v1507
  %v1533 = vrot.slane %v1532, 4
  %v1534 = vmax.f32 %v1532, %v1533
  %v1535 = vrot.slane %v1534, 2
  %v1536 = vmax.f32 %v1534, %v1535
  %v1537 = vrot.slane %v1536, 1
  %v1538 = vmax.f32 %v1536, %v1537
  %v1539 = vmax.f32 %v1508, %v1509
  %v1540 = vrot.slane %v1539, 4
  %v1541 = vmax.f32 %v1539, %v1540
  %v1542 = vrot.slane %v1541, 2
  %v1543 = vmax.f32 %v1541, %v1542
  %v1544 = vrot.slane %v1543, 1
  %v1545 = vmax.f32 %v1543, %v1544
  %v1546 = vmax.f32 %v1510, %v1511
  %v1547 = vrot.slane %v1546, 4
  %v1548 = vmax.f32 %v1546, %v1547
  %v1549 = vrot.slane %v1548, 2
  %v1550 = vmax.f32 %v1548, %v1549
  %v1551 = vrot.slane %v1550, 1
  %v1552 = vmax.f32 %v1550, %v1551
  %v1553 = vmax.f32 %v1512, %v1513
  %v1554 = vrot.slane %v1553, 4
  %v1555 = vmax.f32 %v1553, %v1554
  %v1556 = vrot.slane %v1555, 2
  %v1557 = vmax.f32 %v1555, %v1556
  %v1558 = vrot.slane %v1557, 1
  %v1559 = vmax.f32 %v1557, %v1558
  %v1560 = vmax.f32 %v1514, %v1515
  %v1561 = vrot.slane %v1560, 4
  %v1562 = vmax.f32 %v1560, %v1561
  %v1563 = vrot.slane %v1562, 2
  %v1564 = vmax.f32 %v1562, %v1563
  %v1565 = vrot.slane %v1564, 1
  %v1566 = vmax.f32 %v1564, %v1565
  %v1567 = vmax.f32 %v1516, %v1517
  %v1568 = vrot.slane %v1567, 4
  %v1569 = vmax.f32 %v1567, %v1568
  %v1570 = vrot.slane %v1569, 2
  %v1571 = vmax.f32 %v1569, %v1570
  %v1572 = vrot.slane %v1571, 1
  %v1573 = vmax.f32 %v1571, %v1572
  %v1582 = vsel %vm800, %v1531, %v1524
  %v1583 = vsel %vm802, %v1538, %v1582
  %v1584 = vsel %vm804, %v1545, %v1583
  %v1585 = vsel %vm806, %v1552, %v1584
  %v1586 = vsel %vm808, %v1559, %v1585
  %v1587 = vsel %vm810, %v1566, %v1586
  %v1588 = vsel %vm812, %v1573, %v1587
  %1590 = vst [vmem:[%s6 + $0x8] sm:$0xff] %v1588
  // Predicated region
  $region26: #{context_cnn_forward.1} parent=0 // pred_check
    _
  $region27: #{context_cnn_forward.1} parent=0 // pred_check_branch
    %1592 = sbr.rel (0) target = $region29
  $region28: #{context_cnn_forward.1} parent=0 // pred_region
    _
  $region29: #{context_cnn_forward.1} parent=0 // pred_fallthru
    _
  // Predicated region
  $region30: #{context_cnn_forward.1} parent=0 // pred_check
    _
  $region31: #{context_cnn_forward.1} parent=0 // pred_check_branch
    %1594 = sbr.rel (0) target = $region33
  $region32: #{context_cnn_forward.1} parent=0 // pred_region
    _
  $region33: #{context_cnn_forward.1} parent=0 // pred_fallthru
    _

</llo_original>
